<compile_context>
chip_gen: v5e
topology: v5e:2x2
jax: 0.10.0
libtpu: 0.0.40
codegen_flags: <defaults>
</compile_context>

<pallas_src>
import numpy as np
import jax
import jax.numpy as jnp
from jax.experimental import pallas as pl
from jax.experimental.pallas import tpu as pltpu

NEG_SLOPE = 0.01     # nn.LeakyReLU default
BN_EPS = 1e-5        # nn.BatchNorm2d default


# ----------------------------- Pallas kernels ------------------------------

def _deconv_stats_kernel(w_ref, x_ref, y_ref, s_ref, q_ref):
    # ConvTranspose2d(k=2, s=2, p=0): every output pixel belongs to exactly one
    # (input pixel, tap) pair, so the whole deconv per batch is one matmul
    #   (4*Cout, Cin) @ (Cin, H*W) -> (4*Cout, H*W)   rows ordered (di, dj, co).
    # Epilogue: per-row sum and sum-of-squares for BatchNorm batch statistics.
    y = jnp.dot(w_ref[...], x_ref[...], preferred_element_type=jnp.float32)
    y_ref[...] = y
    s_ref[...] = jnp.sum(y, axis=1, keepdims=True)
    q_ref[...] = jnp.sum(y * y, axis=1, keepdims=True)


def _bn_lrelu_resize_kernel(scale_ref, shift_ref, y_ref, a_ref, o_ref):
    # Fused BN normalize (per-(tap,channel) scale/shift broadcast over lanes),
    # LeakyReLU, then bilinear resize as 4 accumulated MXU matmuls (one per deconv
    # tap), producing a lane-dense (Cout, Hout*Wout) output tile per batch.
    z = y_ref[...] * scale_ref[...] + shift_ref[...]          # (4*Cout, H*W)
    z = jnp.where(z >= 0.0, z, NEG_SLOPE * z)
    cout = o_ref.shape[0]
    acc = jnp.zeros(o_ref.shape, jnp.float32)
    for t in range(4):                                        # static 4-tap loop
        acc += jnp.dot(z[t * cout:(t + 1) * cout, :], a_ref[t],
                       preferred_element_type=jnp.float32)
    o_ref[...] = acc


# ------------------------------- glue / wrapper -----------------------------

def bilinear_matrix(in_size, out_size):
    """1-D interpolation weights matching F.interpolate(mode='bilinear',
    align_corners=False): out = A @ in, A is (out_size, in_size)."""
    scale = in_size / out_size
    o = np.arange(out_size)
    src = (o + 0.5) * scale - 0.5
    src = np.maximum(src, 0.0)
    i0 = np.minimum(np.floor(src).astype(np.int64), in_size - 1)
    i1 = np.minimum(i0 + 1, in_size - 1)
    lam = np.clip(src - i0, 0.0, 1.0).astype(np.float32)
    a = np.zeros((out_size, in_size), dtype=np.float32)
    a[o, i0] += (1.0 - lam)
    a[o, i1] += lam
    return a


def _tap_interp_matrices(H, W, Hout, Wout):
    """Per-tap bilinear matrices a_taps[(di,dj), (i,j), (ho,wo)] =
    A_h[ho, 2i+di] * A_w[wo, 2j+dj]; folds the k=2,s=2 tap scatter into the resize."""
    Hc, Wc = 2 * H, 2 * W
    ah = bilinear_matrix(Hc, Hout).reshape(Hout, H, 2)        # [ho, i, di]
    aw = bilinear_matrix(Wc, Wout).reshape(Wout, W, 2)        # [wo, j, dj]
    a = np.einsum('hia,wjb->abijhw', ah, aw)                  # (2,2,H,W,Hout,Wout)
    return a.reshape(4, H * W, Hout * Wout)


def deconv_block_forward(x, weight, bias, gamma, beta, output_lim=(18, 18)):
    """x: (N, Cin, H, W) f32 NCHW. weight: (Cin, Cout, 2, 2) (PyTorch ConvTranspose2d
    layout). Returns (N, Cout, output_lim[0], output_lim[1]) f32 NCHW."""
    del bias  # per-channel bias before training-mode BN is cancelled by the batch mean
    N, Cin, H, W = x.shape
    Cout = weight.shape[1]
    Hout, Wout = output_lim
    HW = H * W
    P = Hout * Wout

    # Channel-first operands: no transpose of x needed (pure reshape of NCHW).
    x3 = x.reshape(N, Cin, HW)
    # Rows ordered (di, dj, co); w2t[(di,dj,co), cin] = weight[cin, co, di, dj].
    w2t = jnp.transpose(weight, (2, 3, 1, 0)).reshape(4 * Cout, Cin)

    # ---- Kernel 1: deconv matmul + fused BN-statistics epilogue ----
    yt, s_part, q_part = pl.pallas_call(
        _deconv_stats_kernel,
        out_shape=(
            jax.ShapeDtypeStruct((N, 4 * Cout, HW), jnp.float32),
            jax.ShapeDtypeStruct((N, 4 * Cout, 1), jnp.float32),
            jax.ShapeDtypeStruct((N, 4 * Cout, 1), jnp.float32),
        ),
        grid=(N,),
        in_specs=[
            pl.BlockSpec((4 * Cout, Cin), lambda n: (0, 0)),
            pl.BlockSpec((None, Cin, HW), lambda n: (n, 0, 0)),
        ],
        out_specs=(
            pl.BlockSpec((None, 4 * Cout, HW), lambda n: (n, 0, 0)),
            pl.BlockSpec((None, 4 * Cout, 1), lambda n: (n, 0, 0)),
            pl.BlockSpec((None, 4 * Cout, 1), lambda n: (n, 0, 0)),
        ),
        compiler_params=pltpu.CompilerParams(
            dimension_semantics=("parallel",)),
    )(w2t, x3)

    # ---- BatchNorm2d (training-mode batch statistics), tiny scalar math in XLA ----
    # TODO(synk): running_mean/running_var buffer updates (training side effect) are
    # not reproduced; only the forward output is (note: those stats would also need
    # the dropped ConvTranspose2d bias added back to the mean).
    m = float(N * 4 * HW)                                     # = N * Hc * Wc
    ch_sum = jnp.sum(s_part, axis=(0, 2)).reshape(4, Cout).sum(axis=0)
    ch_sq = jnp.sum(q_part, axis=(0, 2)).reshape(4, Cout).sum(axis=0)
    mean = ch_sum / m
    var = jnp.maximum(ch_sq / m - mean * mean, 0.0)           # clamp: avoid NaN from cancellation
    scale = gamma / jnp.sqrt(var + BN_EPS)
    shift = beta - mean * scale
    # Broadcast to the (di, dj, co) row ordering of yt, one lane wide for broadcasting.
    scale4 = jnp.tile(scale, 4).reshape(4 * Cout, 1)
    shift4 = jnp.tile(shift, 4).reshape(4 * Cout, 1)

    # ---- Kernel 2: fused BN normalize + LeakyReLU + bilinear resize ----
    a_taps = jnp.asarray(_tap_interp_matrices(H, W, Hout, Wout))   # (4, HW, Hout*Wout)
    out = pl.pallas_call(
        _bn_lrelu_resize_kernel,
        out_shape=jax.ShapeDtypeStruct((N, Cout, P), jnp.float32),
        grid=(N,),
        in_specs=[
            pl.BlockSpec((4 * Cout, 1), lambda n: (0, 0)),
            pl.BlockSpec((4 * Cout, 1), lambda n: (0, 0)),
            pl.BlockSpec((None, 4 * Cout, HW), lambda n: (n, 0, 0)),
            pl.BlockSpec((4, HW, P), lambda n: (0, 0, 0)),
        ],
        out_specs=pl.BlockSpec((None, Cout, P), lambda n: (n, 0, 0)),
        compiler_params=pltpu.CompilerParams(
            dimension_semantics=("parallel",)),
    )(scale4, shift4, yt, a_taps)

    # Pure reshape (lane dim already (ho, wo)-ordered): output is NCHW with no transpose.
    return out.reshape(N, Cout, Hout, Wout)


# ---------------------------------- main ------------------------------------

if __name__ == "__main__":
    key = jax.random.PRNGKey(0)
    k_x, k_w, k_b = jax.random.split(key, 3)

    N, Cin, Cout, H, W = 2, 8, 8, 8, 8          # deconv: 8x8 -> 16x16, resize -> 18x18
    x = jax.random.normal(k_x, (N, Cin, H, W), dtype=jnp.float32)

    # Deterministic synthetic parameters (ConvTranspose2d weight layout: Cin, Cout, kh, kw)
    fan = Cin * 2 * 2
    weight = jax.random.normal(k_w, (Cin, Cout, 2, 2), dtype=jnp.float32) / np.sqrt(fan)
    bias = 0.1 * jax.random.normal(k_b, (Cout,), dtype=jnp.float32)
    gamma = jnp.ones((Cout,), jnp.float32)      # BatchNorm2d affine init
    beta = jnp.zeros((Cout,), jnp.float32)

    out = deconv_block_forward(x, weight, bias, gamma, beta, output_lim=(18, 18))
    out = jax.block_until_ready(out)

    assert out.shape == (N, Cout, 18, 18), out.shape
    assert bool(jnp.all(jnp.isfinite(out)))
    print("KERNEL_OK")
</pallas_src>

<mosaic_0001>
module attributes {stable_mosaic.version = 11 : i64} {
  func.func @_deconv_stats_kernel(%arg0: i32, %arg1: memref<32x8xf32, #tpu.memory_space<vmem>>, %arg2: memref<1x8x64xf32, #tpu.memory_space<vmem>>, %arg3: memref<1x32x64xf32, #tpu.memory_space<vmem>>, %arg4: memref<1x32x1xf32, #tpu.memory_space<vmem>>, %arg5: memref<1x32x1xf32, #tpu.memory_space<vmem>>) attributes {dimension_semantics = [#tpu.dimension_semantics<parallel>], iteration_bounds = array<i64: 2>, scalar_prefetch = 0 : i64, scratch_operands = 0 : i64, tpu.core_type = #tpu.core_type<tc>, window_params = [{pipeline_mode = #tpu.pipeline_mode<synchronous>, transform_indices = @transform_0, window_bounds = array<i64: 32, 8>}, {transform_indices = @transform_1, window_bounds = array<i64: 1, 8, 64>}, {transform_indices = @transform_2, window_bounds = array<i64: 1, 32, 64>}, {transform_indices = @transform_3, window_bounds = array<i64: 1, 32, 1>}, {transform_indices = @transform_4, window_bounds = array<i64: 1, 32, 1>}]} {
    %c0 = arith.constant 0 : index
    %c0_0 = arith.constant 0 : index
    %0 = vector.load %arg1[%c0, %c0_0] : memref<32x8xf32, #tpu.memory_space<vmem>>, vector<32x8xf32>
    %c0_1 = arith.constant 0 : index
    %c0_2 = arith.constant 0 : index
    %c0_3 = arith.constant 0 : index
    %1 = vector.load %arg2[%c0_1, %c0_2, %c0_3] : memref<1x8x64xf32, #tpu.memory_space<vmem>>, vector<1x8x64xf32>
    %2 = vector.shape_cast %1 : vector<1x8x64xf32> to vector<8x64xf32>
    %cst = arith.constant dense<0.000000e+00> : vector<32x64xf32>
    %3 = tpu.matmul %0, %2, %cst {dimension_numbers = #tpu.dot_dimension_numbers<[1], [0], [0], [1], [0, 0, 1, 1], [], []>} : vector<32x8xf32>, vector<8x64xf32>, vector<32x64xf32> -> vector<32x64xf32>
    %c0_4 = arith.constant 0 : index
    %c0_5 = arith.constant 0 : index
    %c0_6 = arith.constant 0 : index
    %4 = vector.load %arg3[%c0_4, %c0_5, %c0_6] : memref<1x32x64xf32, #tpu.memory_space<vmem>>, vector<1x32x64xf32>
    %5 = vector.shape_cast %4 : vector<1x32x64xf32> to vector<32x64xf32>
    %6 = vector.shape_cast %3 : vector<32x64xf32> to vector<1x32x64xf32>
    tpu.vector_store %arg3[%c0_4, %c0_5, %c0_6], %6 {strides = array<i32>} : memref<1x32x64xf32, #tpu.memory_space<vmem>>, vector<1x32x64xf32>,
    %cst_7 = arith.constant dense<0.000000e+00> : vector<32xf32>
    %7 = vector.multi_reduction <add>, %3, %cst_7 [1] : vector<32x64xf32> to vector<32xf32>
    %8 = vector.shape_cast %7 : vector<32xf32> to vector<32x1xf32>
    %c0_8 = arith.constant 0 : index
    %c0_9 = arith.constant 0 : index
    %c0_10 = arith.constant 0 : index
    %9 = vector.load %arg4[%c0_8, %c0_9, %c0_10] : memref<1x32x1xf32, #tpu.memory_space<vmem>>, vector<1x32x1xf32>
    %10 = vector.shape_cast %9 : vector<1x32x1xf32> to vector<32x1xf32>
    %11 = vector.shape_cast %8 : vector<32x1xf32> to vector<1x32x1xf32>
    tpu.vector_store %arg4[%c0_8, %c0_9, %c0_10], %11 {strides = array<i32>} : memref<1x32x1xf32, #tpu.memory_space<vmem>>, vector<1x32x1xf32>,
    %12 = arith.mulf %3, %3 : vector<32x64xf32>
    %cst_11 = arith.constant dense<0.000000e+00> : vector<32xf32>
    %13 = vector.multi_reduction <add>, %12, %cst_11 [1] : vector<32x64xf32> to vector<32xf32>
    %14 = vector.shape_cast %13 : vector<32xf32> to vector<32x1xf32>
    %c0_12 = arith.constant 0 : index
    %c0_13 = arith.constant 0 : index
    %c0_14 = arith.constant 0 : index
    %15 = vector.load %arg5[%c0_12, %c0_13, %c0_14] : memref<1x32x1xf32, #tpu.memory_space<vmem>>, vector<1x32x1xf32>
    %16 = vector.shape_cast %15 : vector<1x32x1xf32> to vector<32x1xf32>
    %17 = vector.shape_cast %14 : vector<32x1xf32> to vector<1x32x1xf32>
    tpu.vector_store %arg5[%c0_12, %c0_13, %c0_14], %17 {strides = array<i32>} : memref<1x32x1xf32, #tpu.memory_space<vmem>>, vector<1x32x1xf32>,
    return
  }
  func.func @transform_0(%arg0: i32) -> (i32, i32) {
    %c0_i32 = arith.constant 0 : i32
    %c0_i32_0 = arith.constant 0 : i32
    %c0_i32_1 = arith.constant 0 : i32
    return %c0_i32, %c0_i32_0 : i32, i32
  }
  func.func @transform_1(%arg0: i32) -> (i32, i32, i32) {
    %c0_i32 = arith.constant 0 : i32
    %c0_i32_0 = arith.constant 0 : i32
    %c0_i32_1 = arith.constant 0 : i32
    return %arg0, %c0_i32, %c0_i32_0 : i32, i32, i32
  }
  func.func @transform_2(%arg0: i32) -> (i32, i32, i32) {
    %c0_i32 = arith.constant 0 : i32
    %c0_i32_0 = arith.constant 0 : i32
    %c0_i32_1 = arith.constant 0 : i32
    return %arg0, %c0_i32, %c0_i32_0 : i32, i32, i32
  }
  func.func @transform_3(%arg0: i32) -> (i32, i32, i32) {
    %c0_i32 = arith.constant 0 : i32
    %c0_i32_0 = arith.constant 0 : i32
    %c0_i32_1 = arith.constant 0 : i32
    return %arg0, %c0_i32, %c0_i32_0 : i32, i32, i32
  }
  func.func @transform_4(%arg0: i32) -> (i32, i32, i32) {
    %c0_i32 = arith.constant 0 : i32
    %c0_i32_0 = arith.constant 0 : i32
    %c0_i32_1 = arith.constant 0 : i32
    return %arg0, %c0_i32, %c0_i32_0 : i32, i32, i32
  }
}

</mosaic_0001>

<llo_original>
// kernel: tpu_custom_call.1
$region0: #{tpu_custom_call.1}
  #allocation0 [shape = 'u32[]', space=smem, size = 0x4, offset = 0x4, fixed_abs, tag = 'smem constant byte address 0x4 - core index']
  #allocation1 [shape = 'u32[72,128]{1,0:T(1,128)}', space=vmem, size = 0x9000, scoped, tag = 'internal scratch']
  %s0 = inlined_call_operand.vmem [shape: f32[32,8], index: 0, kind: input, shape index: {}]
  %s1 = inlined_call_operand.vmem [shape: f32[2,8,64], index: 1, kind: input, shape index: {}]
  %s2 = inlined_call_operand.hbm [shape: f32[2,32,64], index: 2, kind: output, shape index: {0}]
  %s3 = inlined_call_operand.vmem [shape: f32[2,32,1], index: 3, kind: output, shape index: {1}]
  %s4 = inlined_call_operand.vmem [shape: f32[2,32,1], index: 4, kind: output, shape index: {2}]
  %5 = xla_tuple %s2, %s3, %s4
  %s6 = sld [smem:[#allocation0]]
  $region57: #{tpu_custom_call.1} parent=0
    _
  %s8 = ssub.s32 1, %s6
  %s9 = scalar_select 0, %s8, %s6
  $region1: #{tpu_custom_call.1} parent=0
    #allocation2 [shape = 'u8[32768]{0}', space=vmem, size = 0x8000, scoped, tag = 'output window, operand 0']
    #allocation3 [shape = 's32[2]{0}', space=sflag, size = 0x8, scoped, tag = 'scoped memory for tpu_custom_call.1']
    %10 = vsyncpa [#allocation3], 0
    %s11 = scalar_lea.sflag [#allocation3], 1
    %12 = vsyncpa %s11, 0
    loop: start=0, step=1, limit=4
    $region2: #{tpu_custom_call.1} parent=1 // loop_pre_header
      _
    $region3: #{tpu_custom_call.1} parent=1 // loop_header
      %s14 = sphi 0, %s18
      %p15 = scmp.ge.s32.totalorder %s14, 4
      %s22 = sphi 0, %s22
      %s24 = sphi 0, %s22
      %s25 = sphi 0, %s24
      %s39 = sphi 0, %s25
      %s45 = sphi 0, %s47
      %s48 = sphi 0, %s45
      %s49 = sphi 0, %s48
      %s65 = sphi 0, %s49
      %s71 = sphi 0, %s73
      %s74 = sphi 0, %s71
      %s75 = sphi 0, %s74
      %s91 = sphi 0, %s75
      %s97 = sphi 0, %s99
      %s100 = sphi 0, %s97
      %s101 = sphi 0, %s100
      %s117 = sphi 0, %s101
      %s123 = sphi 0, %s125
      %s126 = sphi 0, %s123
      %s127 = sphi 0, %s126
      %s143 = sphi 0, %s127
    $region4: #{tpu_custom_call.1} parent=1 // loop_header_branch
      %17 = sbr.rel (%p15) target = $region8
    $region5: #{tpu_custom_call.1} parent=1 // loop_body
      %s19 = ssub.s32 %s14, 1
      %s20 = ssub.s32 %s14, 2
      %s21 = sadd.s32 %s14, 1
      %s23 = sadd.s32 %s22, 1
      %p26 = scmp.eq.s32.totalorder %s14, 1
      %p27 = scmp.ne.s32.totalorder %s22, %s24
      %p28 = scmp.eq.s32.totalorder %s14, 0
      %p29 = por %p27, %p28
      %p30 = scmp.ne.s32.totalorder %s22, %s24
      %p31 = scmp.eq.s32.totalorder %s19, 1
      %p32 = por %p30, %p31
      %p33 = scmp.ne.s32.totalorder %s24, %s25
      %p34 = scmp.eq.s32.totalorder %s19, 0
      %p35 = por %p33, %p34
      %p36 = scmp.ne.s32.totalorder %s24, %s25
      %p37 = scmp.eq.s32.totalorder %s20, 1
      %p38 = por %p36, %p37
      %p40 = scmp.ne.s32.totalorder %s25, %s39
      %p41 = scmp.eq.s32.totalorder %s20, 0
      %p42 = por %p40, %p41
      %s43 = ssub.s32 %s14, %s21
      %p44 = scmp.eq.s32.totalorder %s43, 0
      %s46 = sadd.s32 %s45, 1
      %s47 = scalar_select %p44, %s45, %s46
      %p50 = pneg %p44
      %p51 = scmp.eq.s32.totalorder %s14, 1
      %p52 = por %p50, %p51
      %p53 = scmp.ne.s32.totalorder %s45, %s48
      %p54 = scmp.eq.s32.totalorder %s14, 0
      %p55 = por %p53, %p54
      %p56 = scmp.ne.s32.totalorder %s45, %s48
      %p57 = scmp.eq.s32.totalorder %s19, 1
      %p58 = por %p56, %p57
      %p59 = scmp.ne.s32.totalorder %s48, %s49
      %p60 = scmp.eq.s32.totalorder %s19, 0
      %p61 = por %p59, %p60
      %p62 = scmp.ne.s32.totalorder %s48, %s49
      %p63 = scmp.eq.s32.totalorder %s20, 1
      %p64 = por %p62, %p63
      %p66 = scmp.ne.s32.totalorder %s49, %s65
      %p67 = scmp.eq.s32.totalorder %s20, 0
      %p68 = por %p66, %p67
      %s69 = ssub.s32 %s14, %s21
      %p70 = scmp.eq.s32.totalorder %s69, 0
      %s72 = sadd.s32 %s71, 1
      %s73 = scalar_select %p70, %s71, %s72
      %p76 = pneg %p70
      %p77 = scmp.eq.s32.totalorder %s14, 1
      %p78 = por %p76, %p77
      %p79 = scmp.ne.s32.totalorder %s71, %s74
      %p80 = scmp.eq.s32.totalorder %s14, 0
      %p81 = por %p79, %p80
      %p82 = scmp.ne.s32.totalorder %s71, %s74
      %p83 = scmp.eq.s32.totalorder %s19, 1
      %p84 = por %p82, %p83
      %p85 = scmp.ne.s32.totalorder %s74, %s75
      %p86 = scmp.eq.s32.totalorder %s19, 0
      %p87 = por %p85, %p86
      %p88 = scmp.ne.s32.totalorder %s74, %s75
      %p89 = scmp.eq.s32.totalorder %s20, 1
      %p90 = por %p88, %p89
      %p92 = scmp.ne.s32.totalorder %s75, %s91
      %p93 = scmp.eq.s32.totalorder %s20, 0
      %p94 = por %p92, %p93
      %s95 = ssub.s32 %s14, %s21
      %p96 = scmp.eq.s32.totalorder %s95, 0
      %s98 = sadd.s32 %s97, 1
      %s99 = scalar_select %p96, %s97, %s98
      %p102 = pneg %p96
      %p103 = scmp.eq.s32.totalorder %s14, 1
      %p104 = por %p102, %p103
      %p105 = scmp.ne.s32.totalorder %s97, %s100
      %p106 = scmp.eq.s32.totalorder %s14, 0
      %p107 = por %p105, %p106
      %p108 = scmp.ne.s32.totalorder %s97, %s100
      %p109 = scmp.eq.s32.totalorder %s19, 1
      %p110 = por %p108, %p109
      %p111 = scmp.ne.s32.totalorder %s100, %s101
      %p112 = scmp.eq.s32.totalorder %s19, 0
      %p113 = por %p111, %p112
      %p114 = scmp.ne.s32.totalorder %s100, %s101
      %p115 = scmp.eq.s32.totalorder %s20, 1
      %p116 = por %p114, %p115
      %p118 = scmp.ne.s32.totalorder %s101, %s117
      %p119 = scmp.eq.s32.totalorder %s20, 0
      %p120 = por %p118, %p119
      %s121 = ssub.s32 %s14, %s21
      %p122 = scmp.eq.s32.totalorder %s121, 0
      %s124 = sadd.s32 %s123, 1
      %s125 = scalar_select %p122, %s123, %s124
      %p128 = pneg %p122
      %p129 = scmp.eq.s32.totalorder %s14, 1
      %p130 = por %p128, %p129
      %p131 = scmp.ne.s32.totalorder %s123, %s126
      %p132 = scmp.eq.s32.totalorder %s14, 0
      %p133 = por %p131, %p132
      %p134 = scmp.ne.s32.totalorder %s123, %s126
      %p135 = scmp.eq.s32.totalorder %s19, 1
      %p136 = por %p134, %p135
      %p137 = scmp.ne.s32.totalorder %s126, %s127
      %p138 = scmp.eq.s32.totalorder %s19, 0
      %p139 = por %p137, %p138
      %p140 = scmp.ne.s32.totalorder %s126, %s127
      %p141 = scmp.eq.s32.totalorder %s20, 1
      %p142 = por %p140, %p141
      %p144 = scmp.ne.s32.totalorder %s127, %s143
      %p145 = scmp.eq.s32.totalorder %s20, 0
      %p146 = por %p144, %p145
      %p147 = scmp.le.s32.totalorder 1, %s14
      %p148 = scmp.lt.s32.totalorder %s14, 3
      %p149 = pnand %p147, %p148
      %p150 = pneg %p149
      // Predicated region
      $region9: #{tpu_custom_call.1} parent=5 // pred_check
        _
      $region10: #{tpu_custom_call.1} parent=5 // pred_check_branch
        %152 = sbr.rel (%p149) target = $region12
      $region11: #{tpu_custom_call.1} parent=5 // pred_region
        %s153 = ssub.s32 %s14, 1
        // Predicated region
        $region13: #{tpu_custom_call.1} parent=11 // pred_check
          %p154 = pneg %p35
        $region14: #{tpu_custom_call.1} parent=11 // pred_check_branch
          %156 = sbr.rel (%p154) target = $region16
        $region15: #{tpu_custom_call.1} parent=11 // pred_region
          _
        $region16: #{tpu_custom_call.1} parent=11 // pred_fallthru
          _
      $region12: #{tpu_custom_call.1} parent=5 // pred_fallthru
        _
      %p157 = scmp.lt.s32.totalorder %s14, 2
      // Predicated region
      $region17: #{tpu_custom_call.1} parent=5 // pred_check
        %p158 = pneg %p157
      $region18: #{tpu_custom_call.1} parent=5 // pred_check_branch
        %160 = sbr.rel (%p158) target = $region20
      $region19: #{tpu_custom_call.1} parent=5 // pred_region
        // Predicated region
        $region21: #{tpu_custom_call.1} parent=19 // pred_check
          %p161 = pneg %p55
        $region22: #{tpu_custom_call.1} parent=19 // pred_check_branch
          %163 = sbr.rel (%p161) target = $region24
        $region23: #{tpu_custom_call.1} parent=19 // pred_region
          %p164 = scmp.lt.s32.totalorder %s14, 1
          %s165 = scalar_select %p164, %s14, 1
          %s166 = smul.addr %s165, 8
          %s167 = scalar_lea.vmem %s1, %s166
        $region24: #{tpu_custom_call.1} parent=19 // pred_fallthru
          _
      $region20: #{tpu_custom_call.1} parent=5 // pred_fallthru
        _
      %p168 = scmp.le.s32.totalorder 1, %s14
      %p169 = scmp.lt.s32.totalorder %s14, 3
      %p170 = pnand %p168, %p169
      %p171 = pneg %p170
      // Predicated region
      $region25: #{tpu_custom_call.1} parent=5 // pred_check
        _
      $region26: #{tpu_custom_call.1} parent=5 // pred_check_branch
        %173 = sbr.rel (%p170) target = $region28
      $region27: #{tpu_custom_call.1} parent=5 // pred_region
        %s174 = ssub.s32 %s14, 1
        %p175 = pneg %p35
        %p176 = pneg %p32
        %p177 = scmp.lt.s32.totalorder %s19, 1
        %s178 = scalar_select %p177, %s19, 1
        %s179 = smul.addr %s178, 8
        %s180 = scalar_lea.vmem %s1, %s179
        %p181 = pneg %p61
        %p182 = pneg %p58
        %p183 = pneg %p87
        %p184 = pneg %p84
        %s185 = sand.u32 %s74, 1
        %s186 = scalar_lea.sflag [#allocation3], %s185
        %s187 = sand.u32 %s74, 1
        %s188 = smul.addr %s187, 32
        %s189 = scalar_lea.vmem [#allocation2], %s188
        %p190 = pneg %p113
        %p191 = pneg %p110
        %p192 = scmp.lt.s32.totalorder %s19, 1
        %s193 = scalar_select %p192, %s19, 1
        %s194 = smul.addr %s193, 4
        %s195 = smul.addr %s194, 8
        %s196 = scalar_lea.vmem %s3, %s195
        %p197 = pneg %p139
        %p198 = pneg %p136
        %p199 = scmp.lt.s32.totalorder %s19, 1
        %s200 = scalar_select %p199, %s19, 1
        %s201 = smul.addr %s200, 4
        %s202 = smul.addr %s201, 8
        %s203 = scalar_lea.vmem %s4, %s202
        %p204 = scmp.lt.s32.totalorder %s19, 1
        %s205 = scalar_select %p204, %s19, 1
        %s206 = smul.addr %s205, 8
        %s207 = scalar_lea.vmem %s1, %s206
        %p208 = scmp.lt.s32.totalorder %s19, 1
        %s209 = scalar_select %p208, %s19, 1
        %s210 = smul.addr %s209, 4
        %s211 = smul.addr %s210, 8
        %s212 = scalar_lea.vmem %s3, %s211
        %p213 = scmp.lt.s32.totalorder %s19, 1
        %s214 = scalar_select %p213, %s19, 1
        %s215 = smul.addr %s214, 4
        %s216 = smul.addr %s215, 8
        %s217 = scalar_lea.vmem %s4, %s216
        %v218 = vld [vmem:[%s0] sm:$0xff]
        %v219 = vld [vmem:[%s0 + $0x8] sm:$0xff]
        %v220 = vld [vmem:[%s0 + $0x10] sm:$0xff]
        %v221 = vld [vmem:[%s0 + $0x18] sm:$0xff]
        %v222 = vld [vmem:[%s207] sm:$0xff]
        %vm223 = vcmask 64512
        %v225 = vsel %vm223, %v218, 0
        %v228 = vsel %vm223, %v219, 0
        %v231 = vsel %vm223, %v220, 0
        %v234 = vsel %vm223, %v221, 0
        %236 = vmatpush.msra.mxu0 0.0
        %237 = vmatpush.msra.mxu0 0.0
        %238 = vmatpush.msra.mxu0 0.0
        %239 = vmatpush.msra.mxu0 0.0
        %240 = vmatpush.msra.mxu0 0.0
        %241 = vmatpush.msra.mxu0 0.0
        %242 = vmatpush.msra.mxu0 0.0
        %243 = vmatpush.msra.mxu0 0.0
        %244 = vmatpush.msra.mxu0 0.0
        %245 = vmatpush.msra.mxu0 0.0
        %246 = vmatpush.msra.mxu0 0.0
        %247 = vmatpush.msra.mxu0 0.0
        %248 = vmatpush.msra.mxu0 0.0
        %249 = vmatpush.msra.mxu0 0.0
        %250 = vmatpush.msra.mxu0 0.0
        %251 = vmatpush.msra.mxu0 %v222
        %252 = vmatmul.f32.gmra.mxu0 %v225
        %v253 = vpop.f32.mrf.mxu0
        %v254 = vadd.f32 0.0, %v253
        %255 = vmatmul.f32.gmra.mxu0 %v228
        %v256 = vpop.f32.mrf.mxu0
        %v257 = vadd.f32 0.0, %v256
        %258 = vmatmul.f32.gmra.mxu0 %v231
        %v259 = vpop.f32.mrf.mxu0
        %v260 = vadd.f32 0.0, %v259
        %261 = vmatmul.f32.gmra.mxu0 %v234
        %v262 = vpop.f32.mrf.mxu0
        %v263 = vadd.f32 0.0, %v262
        %264 = vdwg.mxu0
        %vm265 = vcmask 523264
        %266 = vst.msk [vmem:[%s189] sm:$0xff] %vm265, %v254
        %267 = vst.msk [vmem:[%s189 + $0x8] sm:$0xff] %vm265, %v257
        %268 = vst.msk [vmem:[%s189 + $0x10] sm:$0xff] %vm265, %v260
        %269 = vst.msk [vmem:[%s189 + $0x18] sm:$0xff] %vm265, %v263
        %v270 = vsel %vm265, %v254, 0.0
        %271 = vadd.xlane.f32.xlu0 %v270
        %v272 = vpop.xlane.xlu0 %271
        %v273 = vsel %vm265, %v257, 0.0
        %274 = vadd.xlane.f32.xlu0 %v273
        %v275 = vpop.xlane.xlu0 %274
        %v276 = vsel %vm265, %v260, 0.0
        %277 = vadd.xlane.f32.xlu0 %v276
        %v278 = vpop.xlane.xlu0 %277
        %v279 = vsel %vm265, %v263, 0.0
        %280 = vadd.xlane.f32.xlu0 %v279
        %v281 = vpop.xlane.xlu0 %280
        %vm282 = vcmask 7168
        %283 = vst.msk [vmem:[%s212] sm:$0xff] %vm282, %v272
        %284 = vst.msk [vmem:[%s212 + $0x8] sm:$0xff] %vm282, %v275
        %285 = vst.msk [vmem:[%s212 + $0x10] sm:$0xff] %vm282, %v278
        %286 = vst.msk [vmem:[%s212 + $0x18] sm:$0xff] %vm282, %v281
        %v287 = vmul.f32 %v254, %v254
        %v288 = vmul.f32 %v257, %v257
        %v289 = vmul.f32 %v260, %v260
        %v290 = vmul.f32 %v263, %v263
        %v291 = vsel %vm265, %v287, 0.0
        %292 = vadd.xlane.f32.xlu0 %v291
        %v293 = vpop.xlane.xlu0 %292
        %v294 = vsel %vm265, %v288, 0.0
        %295 = vadd.xlane.f32.xlu0 %v294
        %v296 = vpop.xlane.xlu0 %295
        %v297 = vsel %vm265, %v289, 0.0
        %298 = vadd.xlane.f32.xlu0 %v297
        %v299 = vpop.xlane.xlu0 %298
        %v300 = vsel %vm265, %v290, 0.0
        %301 = vadd.xlane.f32.xlu0 %v300
        %v302 = vpop.xlane.xlu0 %301
        %303 = vst.msk [vmem:[%s217] sm:$0xff] %vm282, %v293
        %304 = vst.msk [vmem:[%s217 + $0x8] sm:$0xff] %vm282, %v296
        %305 = vst.msk [vmem:[%s217 + $0x10] sm:$0xff] %vm282, %v299
        %306 = vst.msk [vmem:[%s217 + $0x18] sm:$0xff] %vm282, %v302
        %s307 = sand.u32 %s74, 1
        %s308 = scalar_lea.sflag [#allocation3], %s307
        %s309 = sand.u32 %s74, 1
        %s310 = smul.addr %s309, 32
        %s311 = scalar_lea.vmem [#allocation2], %s310
        %p312 = scmp.lt.s32.totalorder %s19, 1
        %s313 = scalar_select %p312, %s19, 1
        %s314 = smul.addr %s313, 4
        %s315 = smul.addr %s314, 8
        %s316 = scalar_lea.vmem %s3, %s315
        %p317 = scmp.lt.s32.totalorder %s19, 1
        %s318 = scalar_select %p317, %s19, 1
        %s319 = smul.addr %s318, 4
        %s320 = smul.addr %s319, 8
        %s321 = scalar_lea.vmem %s4, %s320
        // Predicated region
        $region29: #{tpu_custom_call.1} parent=27 // pred_check
          %p322 = pneg %p84
        $region30: #{tpu_custom_call.1} parent=27 // pred_check_branch
          %324 = sbr.rel (%p322) target = $region32
        $region31: #{tpu_custom_call.1} parent=27 // pred_region
          %326 = vsyncadd %s308, 0
          %s327 = smul.addr %s19, 4
          %s328 = smul.addr %s327, 8
          %s329 = scalar_lea.hbm %s2, %s328
          %s330 = sshll.u32 %s311, 4
          %s331 = int_to_ptr.vmem [resolvable:$true] %s330
          %s332 = sshll.u32 %s329, 4
          %s333 = int_to_ptr.hbm [resolvable:$true] %s332
          %338 = dma.vmem_to_hbm [thread:$0]  %s331, 512, %s333, %s308, 128, 128, 8
        $region32: #{tpu_custom_call.1} parent=27 // pred_fallthru
          _
        // Predicated region
        $region33: #{tpu_custom_call.1} parent=27 // pred_check
          %p339 = pneg %p110
        $region34: #{tpu_custom_call.1} parent=27 // pred_check_branch
          %341 = sbr.rel (%p339) target = $region36
        $region35: #{tpu_custom_call.1} parent=27 // pred_region
          _
        $region36: #{tpu_custom_call.1} parent=27 // pred_fallthru
          _
        // Predicated region
        $region37: #{tpu_custom_call.1} parent=27 // pred_check
          %p342 = pneg %p136
        $region38: #{tpu_custom_call.1} parent=27 // pred_check_branch
          %344 = sbr.rel (%p342) target = $region40
        $region39: #{tpu_custom_call.1} parent=27 // pred_region
          _
        $region40: #{tpu_custom_call.1} parent=27 // pred_fallthru
          _
      $region28: #{tpu_custom_call.1} parent=5 // pred_fallthru
        _
      %p345 = scmp.le.s32.totalorder 2, %s14
      // Predicated region
      $region41: #{tpu_custom_call.1} parent=5 // pred_check
        %p346 = pneg %p345
      $region42: #{tpu_custom_call.1} parent=5 // pred_check_branch
        %348 = sbr.rel (%p346) target = $region44
      $region43: #{tpu_custom_call.1} parent=5 // pred_region
        %s349 = ssub.s32 %s14, 2
        // Predicated region
        $region45: #{tpu_custom_call.1} parent=43 // pred_check
          %p350 = pneg %p90
        $region46: #{tpu_custom_call.1} parent=43 // pred_check_branch
          %352 = sbr.rel (%p350) target = $region48
        $region47: #{tpu_custom_call.1} parent=43 // pred_region
          %s353 = sand.u32 %s75, 1
          %s354 = scalar_lea.sflag [#allocation3], %s353
          %s355 = sand.u32 %s75, 1
          %s356 = smul.addr %s355, 32
          %s357 = scalar_lea.vmem [#allocation2], %s356
          %359 = dma.done %s354, 512
        $region48: #{tpu_custom_call.1} parent=43 // pred_fallthru
          _
        // Predicated region
        $region49: #{tpu_custom_call.1} parent=43 // pred_check
          %p360 = pneg %p116
        $region50: #{tpu_custom_call.1} parent=43 // pred_check_branch
          %362 = sbr.rel (%p360) target = $region52
        $region51: #{tpu_custom_call.1} parent=43 // pred_region
          %p363 = scmp.lt.s32.totalorder %s20, 1
          %s364 = scalar_select %p363, %s20, 1
          %s365 = smul.addr %s364, 4
          %s366 = smul.addr %s365, 8
          %s367 = scalar_lea.vmem %s3, %s366
        $region52: #{tpu_custom_call.1} parent=43 // pred_fallthru
          _
        // Predicated region
        $region53: #{tpu_custom_call.1} parent=43 // pred_check
          %p368 = pneg %p142
        $region54: #{tpu_custom_call.1} parent=43 // pred_check_branch
          %370 = sbr.rel (%p368) target = $region56
        $region55: #{tpu_custom_call.1} parent=43 // pred_region
          %p371 = scmp.lt.s32.totalorder %s20, 1
          %s372 = scalar_select %p371, %s20, 1
          %s373 = smul.addr %s372, 4
          %s374 = smul.addr %s373, 8
          %s375 = scalar_lea.vmem %s4, %s374
        $region56: #{tpu_custom_call.1} parent=43 // pred_fallthru
          _
      $region44: #{tpu_custom_call.1} parent=5 // pred_fallthru
        _
    $region6: #{tpu_custom_call.1} parent=1 // loop_footer
      %s18 = sadd.s32 1, %s14
    $region7: #{tpu_custom_call.1} parent=1 // loop_footer_branch
      %13 = sbr.rel target = $region3
    $region8: #{tpu_custom_call.1} parent=1 // loop_exit
      _
    %376 = vsyncpa [#allocation3], 1
    %s377 = scalar_lea.sflag [#allocation3], 1
    %378 = vsyncpa %s377, 1

</llo_original>
